<compile_context>
chip_gen: v7x
topology: tpu7x:2x2x1
jax: 0.10.0
libtpu: 0.0.40
codegen_flags: <defaults>
</compile_context>

<pallas_src>
import functools
import math

import jax
import jax.numpy as jnp
from jax.experimental import pallas as pl
from jax.experimental.pallas import tpu as pltpu

_LANES = 128
_MAX_TILE_ROWS = 1024
_MAX_FOLDED_LANES = 2048
_VMEM_TILE_BUDGET = 8 * 1024 * 1024  # ~4 live tiles; safe under v5e's 16 MiB scoped VMEM


def _stats_kernel(x_ref, sum_ref, sumsq_ref, *, rows, tile_rows, mask_tail):
    # Accumulate per-(folded-)channel column sums and sums of squares in f32.
    @pl.when(pl.program_id(0) == 0)
    def _init():
        sum_ref[...] = jnp.zeros_like(sum_ref)
        sumsq_ref[...] = jnp.zeros_like(sumsq_ref)

    x = x_ref[...].astype(jnp.float32)
    if mask_tail:
        # Last tile may read rows past the array end (undefined values): zero them.
        row0 = pl.program_id(0) * tile_rows
        rid = row0 + jax.lax.broadcasted_iota(jnp.int32, x.shape, 0)
        x = jnp.where(rid < rows, x, 0.0)
    sum_ref[...] += jnp.sum(x, axis=0, keepdims=True)
    sumsq_ref[...] += jnp.sum(x * x, axis=0, keepdims=True)


def _normalize_kernel(x_ref, scale_ref, shift_ref, o_ref):
    # y = x * scale + shift, elementwise in the input dtype (bf16 stays bf16).
    # Out-of-bounds tail writes (if any) are clipped by Pallas.
    o_ref[...] = x_ref[...] * scale_ref[...] + shift_ref[...]


def batchnorm_last_dim(x, weight, bias, eps=1e-5):
    """Training-mode BatchNorm applied over the last dim of a (B, N, C) tensor."""
    B, N, C = x.shape
    M = B * N
    itemsize = jnp.dtype(x.dtype).itemsize

    # Lane folding: pack k rows into the lane dim so k*C is a multiple of 128
    # (full-width, unmasked vst). Only done when it is a pure view reshape.
    g = math.gcd(C, _LANES)
    k = _LANES // g
    if k > 1 and (M % k != 0 or k * C > _MAX_FOLDED_LANES):
        k = 1
    Cf = k * C
    Mf = M // k

    xf = x.reshape(Mf, Cf)  # contiguous view reshape, no data movement

    # Tile rows: sublane-aligned, as large as the VMEM budget comfortably allows.
    row_align = max(8, 32 // itemsize)  # 8 (f32), 16 (bf16), 32 (int8/fp8)
    tm_cap = max(row_align, _VMEM_TILE_BUDGET // (4 * Cf * itemsize))
    tm = min(_MAX_TILE_ROWS, tm_cap)
    tm = max(row_align, (tm // row_align) * row_align)
    if tm >= Mf:
        tm = Mf  # single full-extent block (allowed even if not sublane-aligned)
    grid_m = pl.cdiv(Mf, tm)
    mask_tail = (Mf % tm) != 0

    # ---- Pass 1: per-(folded)-channel sum and sum of squares (f32) ----
    sum_c, sumsq_c = pl.pallas_call(
        functools.partial(_stats_kernel, rows=Mf, tile_rows=tm, mask_tail=mask_tail),
        out_shape=(
            jax.ShapeDtypeStruct((1, Cf), jnp.float32),
            jax.ShapeDtypeStruct((1, Cf), jnp.float32),
        ),
        grid=(grid_m,),
        in_specs=[pl.BlockSpec((tm, Cf), lambda i: (i, 0))],
        out_specs=(
            pl.BlockSpec((1, Cf), lambda i: (0, 0)),  # resident accumulator
            pl.BlockSpec((1, Cf), lambda i: (0, 0)),  # resident accumulator
        ),
        compiler_params=pltpu.CompilerParams(
            dimension_semantics=("arbitrary",),  # reduction into shared output block
        ),
        cost_estimate=pl.CostEstimate(
            flops=3 * M * C,
            transcendentals=0,
            bytes_accessed=M * C * itemsize + 2 * Cf * 4,
        ),
    )(xf)

    # ---- Tiny plain-JAX combine + one-time affine fold (O(C) work) ----
    s = sum_c.reshape(k, C).sum(axis=0)
    ss = sumsq_c.reshape(k, C).sum(axis=0)
    mean = s / M
    var = jnp.maximum(ss / M - mean * mean, 0.0)  # biased variance, f32 accumulation
    inv_std = jax.lax.rsqrt(var + eps)
    scale = weight.astype(jnp.float32) * inv_std
    shift = bias.astype(jnp.float32) - mean * scale
    scale_f = jnp.tile(scale, k).reshape(1, Cf).astype(x.dtype)
    shift_f = jnp.tile(shift, k).reshape(1, Cf).astype(x.dtype)

    # ---- Pass 2: streaming y = x * scale + shift ----
    outf = pl.pallas_call(
        _normalize_kernel,
        out_shape=jax.ShapeDtypeStruct((Mf, Cf), x.dtype),
        grid=(grid_m,),
        in_specs=[
            pl.BlockSpec((tm, Cf), lambda i: (i, 0)),
            pl.BlockSpec((1, Cf), lambda i: (0, 0)),  # stays resident in VMEM
            pl.BlockSpec((1, Cf), lambda i: (0, 0)),  # stays resident in VMEM
        ],
        out_specs=pl.BlockSpec((tm, Cf), lambda i: (i, 0)),
        compiler_params=pltpu.CompilerParams(
            dimension_semantics=("parallel",),  # megacore-splittable on v7x
        ),
        cost_estimate=pl.CostEstimate(
            flops=2 * M * C,
            transcendentals=0,
            bytes_accessed=2 * M * C * itemsize,
        ),
    )(xf, scale_f, shift_f)

    return outf.reshape(B, N, C)


if __name__ == "__main__":
    key = jax.random.PRNGKey(0)
    kx, kw, kb = jax.random.split(key, 3)

    B, N, C = 2, 8, 32  # (batch, seq, channels) -> BatchNorm1d(C) over last dim
    x = jax.random.normal(kx, (B, N, C), dtype=jnp.float32)

    # PyTorch default init is weight=1, bias=0; perturb so the affine path is exercised.
    weight = 1.0 + 0.1 * jax.random.normal(kw, (C,), dtype=jnp.float32)
    bias = 0.1 * jax.random.normal(kb, (C,), dtype=jnp.float32)
    eps = 1e-5

    out = jax.block_until_ready(batchnorm_last_dim(x, weight, bias, eps=eps))

    # Pure-JAX reference (training-mode batch stats, biased variance).
    mean = jnp.mean(x, axis=(0, 1), keepdims=True)
    var = jnp.mean((x - mean) ** 2, axis=(0, 1), keepdims=True)
    ref = (x - mean) / jnp.sqrt(var + eps) * weight + bias
    assert jnp.allclose(out, ref, atol=2e-5, rtol=2e-5), "mismatch vs reference"

    print("KERNEL_OK")
</pallas_src>

<mosaic_0001>
module attributes {stable_mosaic.version = 11 : i64} {
  func.func @_stats_kernel(%arg0: i32, %arg1: memref<4x128xf32, #tpu.memory_space<vmem>>, %arg2: memref<1x128xf32, #tpu.memory_space<vmem>>, %arg3: memref<1x128xf32, #tpu.memory_space<vmem>>) attributes {dimension_semantics = [#tpu.dimension_semantics<arbitrary>], iteration_bounds = array<i64: 1>, scalar_prefetch = 0 : i64, scratch_operands = 0 : i64, tpu.core_type = #tpu.core_type<tc>, window_params = [{transform_indices = @transform_0, window_bounds = array<i64: 4, 128>}, {pipeline_mode = #tpu.pipeline_mode<synchronous>, transform_indices = @transform_1, window_bounds = array<i64: 1, 128>}, {pipeline_mode = #tpu.pipeline_mode<synchronous>, transform_indices = @transform_2, window_bounds = array<i64: 1, 128>}]} {
    %c0_i32 = arith.constant 0 : i32
    %0 = arith.cmpi eq, %arg0, %c0_i32 : i32
    %1 = arith.extui %0 : i1 to i32
    %c0_i32_0 = arith.constant 0 : i32
    %2 = arith.cmpi ne, %1, %c0_i32_0 : i32
    scf.if %2 {
      %cst_11 = arith.constant 0.000000e+00 : f32
      %15 = vector.broadcast %cst_11 : f32 to vector<1x128xf32>
      %c0_12 = arith.constant 0 : index
      %c0_13 = arith.constant 0 : index
      %16 = vector.load %arg2[%c0_12, %c0_13] : memref<1x128xf32, #tpu.memory_space<vmem>>, vector<1x128xf32>
      tpu.vector_store %arg2[%c0_12, %c0_13], %15 {strides = array<i32>} : memref<1x128xf32, #tpu.memory_space<vmem>>, vector<1x128xf32>,
      %cst_14 = arith.constant 0.000000e+00 : f32
      %17 = vector.broadcast %cst_14 : f32 to vector<1x128xf32>
      %c0_15 = arith.constant 0 : index
      %c0_16 = arith.constant 0 : index
      %18 = vector.load %arg3[%c0_15, %c0_16] : memref<1x128xf32, #tpu.memory_space<vmem>>, vector<1x128xf32>
      tpu.vector_store %arg3[%c0_15, %c0_16], %17 {strides = array<i32>} : memref<1x128xf32, #tpu.memory_space<vmem>>, vector<1x128xf32>,
    } else {
    }
    %c0 = arith.constant 0 : index
    %c0_1 = arith.constant 0 : index
    %3 = vector.load %arg1[%c0, %c0_1] : memref<4x128xf32, #tpu.memory_space<vmem>>, vector<4x128xf32>
    %c0_2 = arith.constant 0 : index
    %c0_3 = arith.constant 0 : index
    %4 = vector.load %arg2[%c0_2, %c0_3] : memref<1x128xf32, #tpu.memory_space<vmem>>, vector<1x128xf32>
    %cst = arith.constant dense<0.000000e+00> : vector<128xf32>
    %5 = vector.multi_reduction <add>, %3, %cst [0] : vector<4x128xf32> to vector<128xf32>
    %6 = vector.shape_cast %5 : vector<128xf32> to vector<1x128xf32>
    %7 = arith.addf %4, %6 : vector<1x128xf32>
    %c0_4 = arith.constant 0 : index
    %c0_5 = arith.constant 0 : index
    %8 = vector.load %arg2[%c0_4, %c0_5] : memref<1x128xf32, #tpu.memory_space<vmem>>, vector<1x128xf32>
    tpu.vector_store %arg2[%c0_4, %c0_5], %7 {strides = array<i32>} : memref<1x128xf32, #tpu.memory_space<vmem>>, vector<1x128xf32>,
    %c0_6 = arith.constant 0 : index
    %c0_7 = arith.constant 0 : index
    %9 = vector.load %arg3[%c0_6, %c0_7] : memref<1x128xf32, #tpu.memory_space<vmem>>, vector<1x128xf32>
    %10 = arith.mulf %3, %3 : vector<4x128xf32>
    %cst_8 = arith.constant dense<0.000000e+00> : vector<128xf32>
    %11 = vector.multi_reduction <add>, %10, %cst_8 [0] : vector<4x128xf32> to vector<128xf32>
    %12 = vector.shape_cast %11 : vector<128xf32> to vector<1x128xf32>
    %13 = arith.addf %9, %12 : vector<1x128xf32>
    %c0_9 = arith.constant 0 : index
    %c0_10 = arith.constant 0 : index
    %14 = vector.load %arg3[%c0_9, %c0_10] : memref<1x128xf32, #tpu.memory_space<vmem>>, vector<1x128xf32>
    tpu.vector_store %arg3[%c0_9, %c0_10], %13 {strides = array<i32>} : memref<1x128xf32, #tpu.memory_space<vmem>>, vector<1x128xf32>,
    return
  }
  func.func @transform_0(%arg0: i32) -> (i32, i32) {
    %c0_i32 = arith.constant 0 : i32
    %c0_i32_0 = arith.constant 0 : i32
    return %arg0, %c0_i32 : i32, i32
  }
  func.func @transform_1(%arg0: i32) -> (i32, i32) {
    %c0_i32 = arith.constant 0 : i32
    %c0_i32_0 = arith.constant 0 : i32
    %c0_i32_1 = arith.constant 0 : i32
    return %c0_i32, %c0_i32_0 : i32, i32
  }
  func.func @transform_2(%arg0: i32) -> (i32, i32) {
    %c0_i32 = arith.constant 0 : i32
    %c0_i32_0 = arith.constant 0 : i32
    %c0_i32_1 = arith.constant 0 : i32
    return %c0_i32, %c0_i32_0 : i32, i32
  }
}

</mosaic_0001>

<llo_original>
// kernel: tpu_custom_call.1
$region0: #{tpu_custom_call.1}
  #allocation0 [shape = 'u32[]', space=smem, size = 0x4, offset = 0x4, fixed_abs, tag = 'smem constant byte address 0x4 - core index']
  #allocation1 [shape = 'u32[144,128]{1,0:T(1,128)}', space=vmem, size = 0x12000, scoped, tag = 'internal scratch']
  %s0 = inlined_call_operand.hbm [shape: f32[4,128], index: 0, kind: input, shape index: {}]
  %s1 = inlined_call_operand.hbm [shape: f32[1,128], index: 1, kind: output, shape index: {0}]
  %s2 = inlined_call_operand.hbm [shape: f32[1,128], index: 2, kind: output, shape index: {1}]
  %3 = xla_tuple %s1, %s2
  %s4 = sld [smem:[#allocation0]]
  $region30: #{tpu_custom_call.1} parent=0
    _
  %s6 = ssub.s32 1, %s4
  %s7 = scalar_select 0, %s6, %s4
  $region1: #{tpu_custom_call.1} parent=0
    #allocation2 [shape = 'u8[2048]{0}', space=vmem, size = 0x800, scoped, tag = 'input window, operand 0, single buffered']
    #allocation3 [shape = 's32[1]{0}', space=sflag, size = 0x4, scoped, tag = 'scoped memory for tpu_custom_call.1']
    #allocation4 [shape = 's32[1]{0}', space=sflag, size = 0x4, scoped, tag = 'scoped memory for tpu_custom_call.1']
    #allocation5 [shape = 'u8[512]{0}', space=vmem, size = 0x400, scoped, tag = 'output window, operand 0, single buffered']
    #allocation6 [shape = 'u8[512]{0}', space=vmem, size = 0x400, scoped, tag = 'output window, operand 1, single buffered']
    #allocation7 [shape = 's32[1]{0}', space=sflag, size = 0x4, scoped, tag = 'scoped memory for tpu_custom_call.1']
    %8 = vsyncpa [#allocation3], 0
    %9 = vsyncpa [#allocation4], 0
    %10 = vsyncpa [#allocation7], 0
    // Predicated region
    $region2: #{tpu_custom_call.1} parent=1 // pred_check
      _
    $region3: #{tpu_custom_call.1} parent=1 // pred_check_branch
      %12 = sbr.rel (0) target = $region5
    $region4: #{tpu_custom_call.1} parent=1 // pred_region
      %s14 = ssub.s32 64, 64
      %15 = vsyncadd [#allocation3], %s14
      %s17 = sshll.u32 [#allocation2], 4
      %s18 = int_to_ptr.vmem [resolvable:$true] %s17
      %20 = dma.hbm_to_vmem [thread:$0]  %s0, 64, %s18, [#allocation3]
    $region5: #{tpu_custom_call.1} parent=1 // pred_fallthru
      _
    // Predicated region
    $region6: #{tpu_custom_call.1} parent=1 // pred_check
      _
    $region7: #{tpu_custom_call.1} parent=1 // pred_check_branch
      %22 = sbr.rel (0) target = $region9
    $region8: #{tpu_custom_call.1} parent=1 // pred_region
      %23 = dma.done [#allocation3], 64
    $region9: #{tpu_custom_call.1} parent=1 // pred_fallthru
      _
    %p24 = scmp.eq.s32.totalorder 0, 0
    // Predicated region
    $region10: #{tpu_custom_call.1} parent=1 // pred_check
      %p25 = pneg %p24
    $region11: #{tpu_custom_call.1} parent=1 // pred_check_branch
      %27 = sbr.rel (%p25) target = $region13
    $region12: #{tpu_custom_call.1} parent=1 // pred_region
      %28 = vst [vmem:[#allocation5] sm:$0x1] 0.0
      %29 = vst [vmem:[#allocation6] sm:$0x1] 0.0
    $region13: #{tpu_custom_call.1} parent=1 // pred_fallthru
      _
    %v30 = vld [vmem:[#allocation2] sm:$0xf]
    %v31 = vld [vmem:[#allocation5] sm:$0x1]
    %vm32 = vcmask 1043456
    %v33 = vsel %vm32, %v30, 0.0
    %v34 = vrot.slane %v33, 4
    %v35 = vadd.f32 %v33, %v34
    %v36 = vrot.slane %v35, 2
    %v37 = vadd.f32 %v35, %v36
    %v38 = vrot.slane %v37, 1
    %v39 = vadd.f32 %v37, %v38
    %v40 = vadd.f32 %v31, %v39
    %41 = vst [vmem:[#allocation5] sm:$0x1] %v40
    %v42 = vld [vmem:[#allocation6] sm:$0x1]
    %v43 = vmul.f32 %v30, %v30
    %v44 = vsel %vm32, %v43, 0.0
    %v45 = vrot.slane %v44, 4
    %v46 = vadd.f32 %v44, %v45
    %v47 = vrot.slane %v46, 2
    %v48 = vadd.f32 %v46, %v47
    %v49 = vrot.slane %v48, 1
    %v50 = vadd.f32 %v48, %v49
    %v51 = vadd.f32 %v42, %v50
    %52 = vst [vmem:[#allocation6] sm:$0x1] %v51
    // Predicated region
    $region14: #{tpu_custom_call.1} parent=1 // pred_check
      _
    $region15: #{tpu_custom_call.1} parent=1 // pred_check_branch
      %54 = sbr.rel (0) target = $region17
    $region16: #{tpu_custom_call.1} parent=1 // pred_region
      %s56 = ssub.s32 16, 16
      %57 = vsyncadd [#allocation4], %s56
      %s59 = sshll.u32 [#allocation5], 4
      %s60 = int_to_ptr.vmem [resolvable:$true] %s59
      %62 = dma.vmem_to_hbm [thread:$0]  %s60, 16, %s1, [#allocation4]
    $region17: #{tpu_custom_call.1} parent=1 // pred_fallthru
      _
    // Predicated region
    $region18: #{tpu_custom_call.1} parent=1 // pred_check
      _
    $region19: #{tpu_custom_call.1} parent=1 // pred_check_branch
      %64 = sbr.rel (0) target = $region21
    $region20: #{tpu_custom_call.1} parent=1 // pred_region
      %s66 = ssub.s32 16, 16
      %67 = vsyncadd [#allocation7], %s66
      %s69 = sshll.u32 [#allocation6], 4
      %s70 = int_to_ptr.vmem [resolvable:$true] %s69
      %72 = dma.vmem_to_hbm [thread:$0]  %s70, 16, %s2, [#allocation7]
    $region21: #{tpu_custom_call.1} parent=1 // pred_fallthru
      _
    // Predicated region
    $region22: #{tpu_custom_call.1} parent=1 // pred_check
      _
    $region23: #{tpu_custom_call.1} parent=1 // pred_check_branch
      %74 = sbr.rel (0) target = $region25
    $region24: #{tpu_custom_call.1} parent=1 // pred_region
      %75 = dma.done [#allocation4], 16
    $region25: #{tpu_custom_call.1} parent=1 // pred_fallthru
      _
    // Predicated region
    $region26: #{tpu_custom_call.1} parent=1 // pred_check
      _
    $region27: #{tpu_custom_call.1} parent=1 // pred_check_branch
      %77 = sbr.rel (0) target = $region29
    $region28: #{tpu_custom_call.1} parent=1 // pred_region
      %78 = dma.done [#allocation7], 16
    $region29: #{tpu_custom_call.1} parent=1 // pred_fallthru
      _
    %79 = vsyncpa [#allocation3], 1
    %80 = vsyncpa [#allocation4], 1
    %81 = vsyncpa [#allocation7], 1

</llo_original>
